<compile_context>
chip_gen: v5e
topology: v5e:2x2
jax: 0.10.0
libtpu: 0.0.40
codegen_flags: <defaults>
</compile_context>

<pallas_src>
import functools

import jax
import jax.numpy as jnp
from jax.experimental import pallas as pl
from jax.experimental.pallas import tpu as pltpu

BN_EPS = 1e-5
LANE = 128  # pad every feature dimension to a full vreg lane width


# ---------------------------------------------------------------------------
# Fused Pallas kernel (whole network, VMEM-resident activations)
# ---------------------------------------------------------------------------
def make_pxz_kernel(n_hidden):
    """Fused kernel: n_hidden x (Linear -> BN(train) -> PReLU) + final Linear.

    Positional ref layout:
      refs[0]                  alpha_ref  SMEM (n_hidden,)          PReLU slopes
      refs[1]                  z_ref      VMEM (B, LANE)            padded input
      refs[2 + 3*i .. +2]      w, gamma, beta per hidden layer      VMEM
      refs[2 + 3*n_hidden]     w_final    VMEM (LANE, LANE)
      refs[3 + 3*n_hidden]     b_final    VMEM (1, LANE)
      refs[4 + 3*n_hidden]     o_ref      VMEM (B, LANE)            padded output
    """

    def kernel(*refs):
        alpha_ref = refs[0]
        x = refs[1][...]                       # (B, LANE) f32
        idx = 2
        for li in range(n_hidden):
            w_ref, g_ref, be_ref = refs[idx], refs[idx + 1], refs[idx + 2]
            idx += 3
            # Linear. Bias is omitted: the training-mode BN mean subtraction
            # below cancels any per-feature bias exactly.
            y = jnp.dot(x, w_ref[...], preferred_element_type=jnp.float32)
            # BatchNorm1d, training mode: biased batch statistics over batch dim.
            mean = jnp.mean(y, axis=0, keepdims=True)          # (1, LANE)
            centered = y - mean
            var = jnp.mean(centered * centered, axis=0, keepdims=True)
            scale = g_ref[...] * jax.lax.rsqrt(var + BN_EPS)   # gamma folded in
            y_bn = centered * scale + be_ref[...]
            # PReLU, single shared slope (PyTorch default), scalar read from SMEM.
            alpha = alpha_ref[li]
            x = jnp.where(y_bn > 0, y_bn, alpha * y_bn)
        wf_ref, bf_ref, o_ref = refs[idx], refs[idx + 1], refs[idx + 2]
        o_ref[...] = (
            jnp.dot(x, wf_ref[...], preferred_element_type=jnp.float32)
            + bf_ref[...]
        )

    return kernel


# ---------------------------------------------------------------------------
# Parameter construction (deterministic, synthetic; matches PyTorch layout)
# ---------------------------------------------------------------------------
def init_pxz_params(key, input_dim, hidden_dims, latent_dim):
    """Parameter pytree matching PXZNetwork.__init__ layer order (unpadded)."""
    dims_in = [latent_dim] + list(reversed(hidden_dims))      # forward-order inputs
    dims_out = list(reversed(hidden_dims)) + [input_dim]      # forward-order outputs

    params = {"hidden": [], "final": None}
    n_hidden = len(hidden_dims)
    keys = jax.random.split(key, len(dims_in) * 2)

    for i, (din, dout) in enumerate(zip(dims_in, dims_out)):
        kw, kb = keys[2 * i], keys[2 * i + 1]
        scale = 1.0 / jnp.sqrt(jnp.float32(din))
        # weights stored transposed (in, out) so the kernel computes x @ W + b.
        w = jax.random.uniform(kw, (din, dout), jnp.float32, -scale, scale)
        b = jax.random.uniform(kb, (1, dout), jnp.float32, -scale, scale)
        if i < n_hidden:
            params["hidden"].append({
                "w": w,
                "b": b,                                          # kept for reference
                "gamma": jnp.ones((1, dout), jnp.float32),       # BN affine weight
                "beta": jnp.zeros((1, dout), jnp.float32),       # BN affine bias
                "alpha": jnp.full((1, 1), 0.25, jnp.float32),    # PReLU slope
            })
        else:
            params["final"] = {"w": w, "b": b}
    return params


def _pad2(a, rows, cols):
    r, c = a.shape
    return jnp.pad(a, ((0, rows - r), (0, cols - c)))


def prepare_kernel_params(params):
    """Zero-pad all feature dims to LANE; stack PReLU slopes for SMEM."""
    padded = {"hidden": [], "final": None, "alpha": None}
    alphas = []
    for layer in params["hidden"]:
        padded["hidden"].append({
            "w": _pad2(layer["w"], LANE, LANE),
            "gamma": _pad2(layer["gamma"], 1, LANE),
            "beta": _pad2(layer["beta"], 1, LANE),
        })
        alphas.append(layer["alpha"].reshape(()))
    padded["final"] = {
        "w": _pad2(params["final"]["w"], LANE, LANE),
        "b": _pad2(params["final"]["b"], 1, LANE),
    }
    padded["alpha"] = jnp.stack(alphas)                          # (n_hidden,)
    return padded


# ---------------------------------------------------------------------------
# Forward pass: one jit, one pallas_call
# ---------------------------------------------------------------------------
@functools.partial(jax.jit, static_argnames=("input_dim",))
def pxz_forward(padded_params, z, *, input_dim):
    n_hidden = len(padded_params["hidden"])
    batch, latent = z.shape
    # lane-pad the input activations (zeros are harmless: weight rows are zero).
    z_pad = jnp.pad(z.astype(jnp.float32), ((0, 0), (0, LANE - latent)))

    vmem = pl.BlockSpec(memory_space=pltpu.MemorySpace.VMEM)
    smem = pl.BlockSpec(memory_space=pltpu.MemorySpace.SMEM)

    inputs = [padded_params["alpha"], z_pad]
    in_specs = [smem, vmem]
    for layer in padded_params["hidden"]:
        inputs += [layer["w"], layer["gamma"], layer["beta"]]
        in_specs += [vmem, vmem, vmem]
    inputs += [padded_params["final"]["w"], padded_params["final"]["b"]]
    in_specs += [vmem, vmem]

    out_pad = pl.pallas_call(
        make_pxz_kernel(n_hidden),
        out_shape=jax.ShapeDtypeStruct((batch, LANE), jnp.float32),
        in_specs=in_specs,
        out_specs=vmem,
    )(*inputs)
    return out_pad[:, :input_dim]


# ---------------------------------------------------------------------------
# Pure-JAX reference (exact PyTorch semantics, including hidden biases)
# ---------------------------------------------------------------------------
def pxz_forward_ref(params, z):
    x = z.astype(jnp.float32)
    for layer in params["hidden"]:
        y = x @ layer["w"] + layer["b"]
        mean = jnp.mean(y, axis=0, keepdims=True)
        var = jnp.mean((y - mean) ** 2, axis=0, keepdims=True)
        y = (y - mean) / jnp.sqrt(var + BN_EPS)
        y = y * layer["gamma"] + layer["beta"]
        a = layer["alpha"][0, 0]
        x = jnp.where(y > 0, y, a * y)
    return x @ params["final"]["w"] + params["final"]["b"]


if __name__ == "__main__":
    # Small, module-consistent shapes: z is (batch, latent_dim).
    batch = 8
    latent_dim = 8
    hidden_dims = [32, 64]   # forward order becomes 64 -> 32
    input_dim = 16

    key = jax.random.PRNGKey(0)
    k_params, k_z = jax.random.split(key)

    params = init_pxz_params(k_params, input_dim, hidden_dims, latent_dim)
    padded_params = prepare_kernel_params(params)
    z = jax.random.normal(k_z, (batch, latent_dim), jnp.float32)

    x_rec = pxz_forward(padded_params, z, input_dim=input_dim)
    x_rec = jax.block_until_ready(x_rec)

    # Sanity check against the pure-JAX reference (with biases: BN cancels them).
    x_ref = jax.block_until_ready(pxz_forward_ref(params, z))
    assert x_rec.shape == (batch, input_dim)
    assert jnp.allclose(x_rec, x_ref, atol=1e-4, rtol=1e-4), "mismatch vs reference"

    print("KERNEL_OK")
</pallas_src>

<mosaic_0001>
module attributes {stable_mosaic.version = 11 : i64} {
  func.func @kernel(%arg0: memref<2xf32, #tpu.memory_space<smem>>, %arg1: memref<8x128xf32, #tpu.memory_space<vmem>>, %arg2: memref<128x128xf32, #tpu.memory_space<vmem>>, %arg3: memref<1x128xf32, #tpu.memory_space<vmem>>, %arg4: memref<1x128xf32, #tpu.memory_space<vmem>>, %arg5: memref<128x128xf32, #tpu.memory_space<vmem>>, %arg6: memref<1x128xf32, #tpu.memory_space<vmem>>, %arg7: memref<1x128xf32, #tpu.memory_space<vmem>>, %arg8: memref<128x128xf32, #tpu.memory_space<vmem>>, %arg9: memref<1x128xf32, #tpu.memory_space<vmem>>, %arg10: memref<8x128xf32, #tpu.memory_space<vmem>>) attributes {dimension_semantics = [], scalar_prefetch = 0 : i64, scratch_operands = 0 : i64, tpu.core_type = #tpu.core_type<tc>} {
    %c0 = arith.constant 0 : index
    %c0_0 = arith.constant 0 : index
    %0 = vector.load %arg1[%c0, %c0_0] : memref<8x128xf32, #tpu.memory_space<vmem>>, vector<8x128xf32>
    %c0_1 = arith.constant 0 : index
    %c0_2 = arith.constant 0 : index
    %1 = vector.load %arg2[%c0_1, %c0_2] : memref<128x128xf32, #tpu.memory_space<vmem>>, vector<128x128xf32>
    %cst = arith.constant dense<0.000000e+00> : vector<8x128xf32>
    %2 = tpu.matmul %0, %1, %cst {dimension_numbers = #tpu.dot_dimension_numbers<[1], [0], [0], [1], [0, 0, 1, 1], [], []>} : vector<8x128xf32>, vector<128x128xf32>, vector<8x128xf32> -> vector<8x128xf32>
    %cst_3 = arith.constant dense<0.000000e+00> : vector<128xf32>
    %3 = vector.multi_reduction <add>, %2, %cst_3 [0] : vector<8x128xf32> to vector<128xf32>
    %4 = vector.shape_cast %3 : vector<128xf32> to vector<1x128xf32>
    %cst_4 = arith.constant 8.000000e+00 : f32
    %5 = vector.broadcast %cst_4 : f32 to vector<1x128xf32>
    %6 = arith.divf %4, %5 : vector<1x128xf32>
    %7 = vector.broadcast %6 : vector<1x128xf32> to vector<8x128xf32>
    %8 = arith.subf %2, %7 : vector<8x128xf32>
    %9 = arith.mulf %8, %8 : vector<8x128xf32>
    %cst_5 = arith.constant dense<0.000000e+00> : vector<128xf32>
    %10 = vector.multi_reduction <add>, %9, %cst_5 [0] : vector<8x128xf32> to vector<128xf32>
    %11 = vector.shape_cast %10 : vector<128xf32> to vector<1x128xf32>
    %cst_6 = arith.constant 8.000000e+00 : f32
    %12 = vector.broadcast %cst_6 : f32 to vector<1x128xf32>
    %13 = arith.divf %11, %12 : vector<1x128xf32>
    %c0_7 = arith.constant 0 : index
    %c0_8 = arith.constant 0 : index
    %14 = vector.load %arg3[%c0_7, %c0_8] : memref<1x128xf32, #tpu.memory_space<vmem>>, vector<1x128xf32>
    %cst_9 = arith.constant 9.99999974E-6 : f32
    %15 = vector.broadcast %cst_9 : f32 to vector<1x128xf32>
    %16 = arith.addf %13, %15 : vector<1x128xf32>
    %17 = math.rsqrt %16 : vector<1x128xf32>
    %18 = arith.mulf %14, %17 : vector<1x128xf32>
    %19 = vector.broadcast %18 : vector<1x128xf32> to vector<8x128xf32>
    %20 = arith.mulf %8, %19 : vector<8x128xf32>
    %c0_10 = arith.constant 0 : index
    %c0_11 = arith.constant 0 : index
    %21 = vector.load %arg4[%c0_10, %c0_11] : memref<1x128xf32, #tpu.memory_space<vmem>>, vector<1x128xf32>
    %22 = vector.broadcast %21 : vector<1x128xf32> to vector<8x128xf32>
    %23 = arith.addf %20, %22 : vector<8x128xf32>
    %c0_12 = arith.constant 0 : index
    %24 = memref.load %arg0[%c0_12] : memref<2xf32, #tpu.memory_space<smem>>
    %cst_13 = arith.constant 0.000000e+00 : f32
    %25 = vector.broadcast %cst_13 : f32 to vector<8x128xf32>
    %26 = arith.cmpf ogt, %23, %25 : vector<8x128xf32>
    %27 = vector.broadcast %24 : f32 to vector<8x128xf32>
    %28 = arith.mulf %27, %23 : vector<8x128xf32>
    %29 = arith.select %26, %23, %28 : vector<8x128xi1>, vector<8x128xf32>
    %c0_14 = arith.constant 0 : index
    %c0_15 = arith.constant 0 : index
    %30 = vector.load %arg5[%c0_14, %c0_15] : memref<128x128xf32, #tpu.memory_space<vmem>>, vector<128x128xf32>
    %cst_16 = arith.constant dense<0.000000e+00> : vector<8x128xf32>
    %31 = tpu.matmul %29, %30, %cst_16 {dimension_numbers = #tpu.dot_dimension_numbers<[1], [0], [0], [1], [0, 0, 1, 1], [], []>} : vector<8x128xf32>, vector<128x128xf32>, vector<8x128xf32> -> vector<8x128xf32>
    %cst_17 = arith.constant dense<0.000000e+00> : vector<128xf32>
    %32 = vector.multi_reduction <add>, %31, %cst_17 [0] : vector<8x128xf32> to vector<128xf32>
    %33 = vector.shape_cast %32 : vector<128xf32> to vector<1x128xf32>
    %cst_18 = arith.constant 8.000000e+00 : f32
    %34 = vector.broadcast %cst_18 : f32 to vector<1x128xf32>
    %35 = arith.divf %33, %34 : vector<1x128xf32>
    %36 = vector.broadcast %35 : vector<1x128xf32> to vector<8x128xf32>
    %37 = arith.subf %31, %36 : vector<8x128xf32>
    %38 = arith.mulf %37, %37 : vector<8x128xf32>
    %cst_19 = arith.constant dense<0.000000e+00> : vector<128xf32>
    %39 = vector.multi_reduction <add>, %38, %cst_19 [0] : vector<8x128xf32> to vector<128xf32>
    %40 = vector.shape_cast %39 : vector<128xf32> to vector<1x128xf32>
    %cst_20 = arith.constant 8.000000e+00 : f32
    %41 = vector.broadcast %cst_20 : f32 to vector<1x128xf32>
    %42 = arith.divf %40, %41 : vector<1x128xf32>
    %c0_21 = arith.constant 0 : index
    %c0_22 = arith.constant 0 : index
    %43 = vector.load %arg6[%c0_21, %c0_22] : memref<1x128xf32, #tpu.memory_space<vmem>>, vector<1x128xf32>
    %cst_23 = arith.constant 9.99999974E-6 : f32
    %44 = vector.broadcast %cst_23 : f32 to vector<1x128xf32>
    %45 = arith.addf %42, %44 : vector<1x128xf32>
    %46 = math.rsqrt %45 : vector<1x128xf32>
    %47 = arith.mulf %43, %46 : vector<1x128xf32>
    %48 = vector.broadcast %47 : vector<1x128xf32> to vector<8x128xf32>
    %49 = arith.mulf %37, %48 : vector<8x128xf32>
    %c0_24 = arith.constant 0 : index
    %c0_25 = arith.constant 0 : index
    %50 = vector.load %arg7[%c0_24, %c0_25] : memref<1x128xf32, #tpu.memory_space<vmem>>, vector<1x128xf32>
    %51 = vector.broadcast %50 : vector<1x128xf32> to vector<8x128xf32>
    %52 = arith.addf %49, %51 : vector<8x128xf32>
    %c1 = arith.constant 1 : index
    %53 = memref.load %arg0[%c1] : memref<2xf32, #tpu.memory_space<smem>>
    %cst_26 = arith.constant 0.000000e+00 : f32
    %54 = vector.broadcast %cst_26 : f32 to vector<8x128xf32>
    %55 = arith.cmpf ogt, %52, %54 : vector<8x128xf32>
    %56 = vector.broadcast %53 : f32 to vector<8x128xf32>
    %57 = arith.mulf %56, %52 : vector<8x128xf32>
    %58 = arith.select %55, %52, %57 : vector<8x128xi1>, vector<8x128xf32>
    %c0_27 = arith.constant 0 : index
    %c0_28 = arith.constant 0 : index
    %59 = vector.load %arg8[%c0_27, %c0_28] : memref<128x128xf32, #tpu.memory_space<vmem>>, vector<128x128xf32>
    %cst_29 = arith.constant dense<0.000000e+00> : vector<8x128xf32>
    %60 = tpu.matmul %58, %59, %cst_29 {dimension_numbers = #tpu.dot_dimension_numbers<[1], [0], [0], [1], [0, 0, 1, 1], [], []>} : vector<8x128xf32>, vector<128x128xf32>, vector<8x128xf32> -> vector<8x128xf32>
    %c0_30 = arith.constant 0 : index
    %c0_31 = arith.constant 0 : index
    %61 = vector.load %arg9[%c0_30, %c0_31] : memref<1x128xf32, #tpu.memory_space<vmem>>, vector<1x128xf32>
    %62 = vector.broadcast %61 : vector<1x128xf32> to vector<8x128xf32>
    %63 = arith.addf %60, %62 : vector<8x128xf32>
    %c0_32 = arith.constant 0 : index
    %c0_33 = arith.constant 0 : index
    %64 = vector.load %arg10[%c0_32, %c0_33] : memref<8x128xf32, #tpu.memory_space<vmem>>, vector<8x128xf32>
    tpu.vector_store %arg10[%c0_32, %c0_33], %63 {strides = array<i32>} : memref<8x128xf32, #tpu.memory_space<vmem>>, vector<8x128xf32>,
    return
  }
}

</mosaic_0001>

<llo_original>
// kernel: pxz_forward.1
$region0: #{pxz_forward.1}
  #allocation0 [shape = 'u32[]', space=smem, size = 0x4, offset = 0x4, fixed_abs, tag = 'smem constant byte address 0x4 - core index']
  #allocation1 [shape = 'u32[72,128]{1,0:T(1,128)}', space=vmem, size = 0x9000, scoped, tag = 'internal scratch']
  %s0 = inlined_call_operand.vmem [shape: f32[2], index: 0, kind: input, shape index: {}]
  %s1 = inlined_call_operand.vmem [shape: f32[8,128], index: 1, kind: input, shape index: {}]
  %s2 = inlined_call_operand.hbm [shape: f32[128,128], index: 2, kind: input, shape index: {}]
  %s3 = inlined_call_operand.vmem [shape: f32[1,128], index: 3, kind: input, shape index: {}]
  %s4 = inlined_call_operand.vmem [shape: f32[1,128], index: 4, kind: input, shape index: {}]
  %s5 = inlined_call_operand.hbm [shape: f32[128,128], index: 5, kind: input, shape index: {}]
  %s6 = inlined_call_operand.vmem [shape: f32[1,128], index: 6, kind: input, shape index: {}]
  %s7 = inlined_call_operand.vmem [shape: f32[1,128], index: 7, kind: input, shape index: {}]
  %s8 = inlined_call_operand.hbm [shape: f32[128,128], index: 8, kind: input, shape index: {}]
  %s9 = inlined_call_operand.vmem [shape: f32[1,128], index: 9, kind: input, shape index: {}]
  %s10 = inlined_call_operand.hbm [shape: f32[8,128], index: 10, kind: output, shape index: {}]
  %s11 = sld [smem:[#allocation0]]
  $region66: #{pxz_forward.1} parent=0
    _
  %s13 = ssub.s32 1, %s11
  %s14 = scalar_select 0, %s13, %s11
  $region1: #{pxz_forward.1} parent=0
    #allocation2 [shape = 'u8[512]{0}', space=smem, size = 0x200, scoped, tag = 'input window, operand 0, single buffered']
    #allocation3 [shape = 's32[1]{0}', space=sflag, size = 0x4, scoped, tag = 'scoped memory for pxz_forward.1']
    #allocation4 [shape = 's32[1]{0}', space=sflag, size = 0x4, scoped, tag = 'scoped memory for pxz_forward.1']
    #allocation5 [shape = 's32[1]{0}', space=sflag, size = 0x4, scoped, tag = 'scoped memory for pxz_forward.1']
    #allocation6 [shape = 'u8[65536]{0}', space=vmem, size = 0x10000, scoped, tag = 'input window, operand 2, single buffered']
    #allocation7 [shape = 'u8[65536]{0}', space=vmem, size = 0x10000, scoped, tag = 'input window, operand 5, single buffered']
    #allocation8 [shape = 's32[1]{0}', space=sflag, size = 0x4, scoped, tag = 'scoped memory for pxz_forward.1']
    #allocation9 [shape = 'u8[65536]{0}', space=vmem, size = 0x10000, scoped, tag = 'input window, operand 8, single buffered']
    #allocation10 [shape = 'u8[4096]{0}', space=vmem, size = 0x1000, scoped, tag = 'output window, operand 0, single buffered']
    %15 = vsyncpa [#allocation5], 0
    %16 = vsyncpa [#allocation3], 0
    %17 = vsyncpa [#allocation8], 0
    %18 = vsyncpa [#allocation4], 0
    // Predicated region
    $region2: #{pxz_forward.1} parent=1 // pred_check
      _
    $region3: #{pxz_forward.1} parent=1 // pred_check_branch
      %20 = sbr.rel (0) target = $region5
    $region4: #{pxz_forward.1} parent=1 // pred_region
      %22 = vsyncadd [#allocation5], 0
      %s24 = sshll.u32 %s0, 4
      %s25 = int_to_ptr.vmem [resolvable:$true] %s24
      %27 = dma.vmem_to_smem %s25, 16, [#allocation2], [#allocation5]
    $region5: #{pxz_forward.1} parent=1 // pred_fallthru
      _
    // Predicated region
    $region6: #{pxz_forward.1} parent=1 // pred_check
      _
    $region7: #{pxz_forward.1} parent=1 // pred_check_branch
      %29 = sbr.rel (0) target = $region9
    $region8: #{pxz_forward.1} parent=1 // pred_region
      _
    $region9: #{pxz_forward.1} parent=1 // pred_fallthru
      _
    // Predicated region
    $region10: #{pxz_forward.1} parent=1 // pred_check
      _
    $region11: #{pxz_forward.1} parent=1 // pred_check_branch
      %31 = sbr.rel (0) target = $region13
    $region12: #{pxz_forward.1} parent=1 // pred_region
      %33 = vsyncadd [#allocation3], 0
      %s34 = sshll.u32 %s2, 4
      %s35 = int_to_ptr.hbm [resolvable:$true] %s34
      %s36 = sshll.u32 [#allocation6], 4
      %s37 = int_to_ptr.vmem [resolvable:$true] %s36
      %42 = dma.hbm_to_vmem [thread:$0]  %s35, 2048, %s37, [#allocation3], 128, 128, 8
    $region13: #{pxz_forward.1} parent=1 // pred_fallthru
      _
    // Predicated region
    $region14: #{pxz_forward.1} parent=1 // pred_check
      _
    $region15: #{pxz_forward.1} parent=1 // pred_check_branch
      %44 = sbr.rel (0) target = $region17
    $region16: #{pxz_forward.1} parent=1 // pred_region
      _
    $region17: #{pxz_forward.1} parent=1 // pred_fallthru
      _
    // Predicated region
    $region18: #{pxz_forward.1} parent=1 // pred_check
      _
    $region19: #{pxz_forward.1} parent=1 // pred_check_branch
      %46 = sbr.rel (0) target = $region21
    $region20: #{pxz_forward.1} parent=1 // pred_region
      _
    $region21: #{pxz_forward.1} parent=1 // pred_fallthru
      _
    // Predicated region
    $region22: #{pxz_forward.1} parent=1 // pred_check
      _
    $region23: #{pxz_forward.1} parent=1 // pred_check_branch
      %48 = sbr.rel (0) target = $region25
    $region24: #{pxz_forward.1} parent=1 // pred_region
      %50 = vsyncadd [#allocation8], 0
      %s51 = sshll.u32 %s5, 4
      %s52 = int_to_ptr.hbm [resolvable:$true] %s51
      %s53 = sshll.u32 [#allocation7], 4
      %s54 = int_to_ptr.vmem [resolvable:$true] %s53
      %59 = dma.hbm_to_vmem [thread:$0]  %s52, 2048, %s54, [#allocation8], 128, 128, 8
    $region25: #{pxz_forward.1} parent=1 // pred_fallthru
      _
    // Predicated region
    $region26: #{pxz_forward.1} parent=1 // pred_check
      _
    $region27: #{pxz_forward.1} parent=1 // pred_check_branch
      %61 = sbr.rel (0) target = $region29
    $region28: #{pxz_forward.1} parent=1 // pred_region
      _
    $region29: #{pxz_forward.1} parent=1 // pred_fallthru
      _
    // Predicated region
    $region30: #{pxz_forward.1} parent=1 // pred_check
      _
    $region31: #{pxz_forward.1} parent=1 // pred_check_branch
      %63 = sbr.rel (0) target = $region33
    $region32: #{pxz_forward.1} parent=1 // pred_region
      _
    $region33: #{pxz_forward.1} parent=1 // pred_fallthru
      _
    // Predicated region
    $region34: #{pxz_forward.1} parent=1 // pred_check
      _
    $region35: #{pxz_forward.1} parent=1 // pred_check_branch
      %65 = sbr.rel (0) target = $region37
    $region36: #{pxz_forward.1} parent=1 // pred_region
      %67 = vsyncadd [#allocation8], 0
      %s68 = sshll.u32 %s8, 4
      %s69 = int_to_ptr.hbm [resolvable:$true] %s68
      %s70 = sshll.u32 [#allocation9], 4
      %s71 = int_to_ptr.vmem [resolvable:$true] %s70
      %76 = dma.hbm_to_vmem [thread:$0]  %s69, 2048, %s71, [#allocation8], 128, 128, 8
    $region37: #{pxz_forward.1} parent=1 // pred_fallthru
      _
    // Predicated region
    $region38: #{pxz_forward.1} parent=1 // pred_check
      _
    $region39: #{pxz_forward.1} parent=1 // pred_check_branch
      %78 = sbr.rel (0) target = $region41
    $region40: #{pxz_forward.1} parent=1 // pred_region
      _
    $region41: #{pxz_forward.1} parent=1 // pred_fallthru
      _
    // Predicated region
    $region42: #{pxz_forward.1} parent=1 // pred_check
      _
    $region43: #{pxz_forward.1} parent=1 // pred_check_branch
      %80 = sbr.rel (0) target = $region45
    $region44: #{pxz_forward.1} parent=1 // pred_region
      %82 = dma.done [#allocation5], 16
    $region45: #{pxz_forward.1} parent=1 // pred_fallthru
      _
    // Predicated region
    $region46: #{pxz_forward.1} parent=1 // pred_check
      _
    $region47: #{pxz_forward.1} parent=1 // pred_check_branch
      %84 = sbr.rel (0) target = $region49
    $region48: #{pxz_forward.1} parent=1 // pred_region
      %86 = dma.done [#allocation3], 2048
    $region49: #{pxz_forward.1} parent=1 // pred_fallthru
      _
    // Predicated region
    $region50: #{pxz_forward.1} parent=1 // pred_check
      _
    $region51: #{pxz_forward.1} parent=1 // pred_check_branch
      %88 = sbr.rel (0) target = $region53
    $region52: #{pxz_forward.1} parent=1 // pred_region
      %90 = dma.done [#allocation8], 2048
    $region53: #{pxz_forward.1} parent=1 // pred_fallthru
      _
    // Predicated region
    $region54: #{pxz_forward.1} parent=1 // pred_check
      _
    $region55: #{pxz_forward.1} parent=1 // pred_check_branch
      %92 = sbr.rel (0) target = $region57
    $region56: #{pxz_forward.1} parent=1 // pred_region
      %94 = dma.done [#allocation8], 2048
    $region57: #{pxz_forward.1} parent=1 // pred_fallthru
      _
    %95 = sfence
    %v96 = vld [vmem:[%s1] sm:$0xff]
    %v97 = vld [vmem:[#allocation6] sm:$0xff]
    %v98 = vld [vmem:[#allocation6 + $0x8] sm:$0xff]
    %v99 = vld [vmem:[#allocation6 + $0x10] sm:$0xff]
    %v100 = vld [vmem:[#allocation6 + $0x18] sm:$0xff]
    %v101 = vld [vmem:[#allocation6 + $0x20] sm:$0xff]
    %v102 = vld [vmem:[#allocation6 + $0x28] sm:$0xff]
    %v103 = vld [vmem:[#allocation6 + $0x30] sm:$0xff]
    %v104 = vld [vmem:[#allocation6 + $0x38] sm:$0xff]
    %v105 = vld [vmem:[#allocation6 + $0x40] sm:$0xff]
    %v106 = vld [vmem:[#allocation6 + $0x48] sm:$0xff]
    %v107 = vld [vmem:[#allocation6 + $0x50] sm:$0xff]
    %v108 = vld [vmem:[#allocation6 + $0x58] sm:$0xff]
    %v109 = vld [vmem:[#allocation6 + $0x60] sm:$0xff]
    %v110 = vld [vmem:[#allocation6 + $0x68] sm:$0xff]
    %v111 = vld [vmem:[#allocation6 + $0x70] sm:$0xff]
    %v112 = vld [vmem:[#allocation6 + $0x78] sm:$0xff]
    %113 = vmatpush.msra.mxu0 %v112
    %114 = vmatpush.msra.mxu0 %v111
    %115 = vmatpush.msra.mxu0 %v110
    %116 = vmatpush.msra.mxu0 %v109
    %117 = vmatpush.msra.mxu0 %v108
    %118 = vmatpush.msra.mxu0 %v107
    %119 = vmatpush.msra.mxu0 %v106
    %120 = vmatpush.msra.mxu0 %v105
    %121 = vmatpush.msra.mxu0 %v104
    %122 = vmatpush.msra.mxu0 %v103
    %123 = vmatpush.msra.mxu0 %v102
    %124 = vmatpush.msra.mxu0 %v101
    %125 = vmatpush.msra.mxu0 %v100
    %126 = vmatpush.msra.mxu0 %v99
    %127 = vmatpush.msra.mxu0 %v98
    %128 = vmatpush.msra.mxu0 %v97
    %129 = vmatmul.f32.gmra.mxu0 %v96
    %v130 = vpop.f32.mrf.mxu0
    %v131 = vadd.f32 0.0, %v130
    %132 = vdwg.mxu0
    %v133 = vrot.slane %v131, 4
    %v134 = vadd.f32 %v131, %v133
    %v135 = vrot.slane %v134, 2
    %v136 = vadd.f32 %v134, %v135
    %v137 = vrot.slane %v136, 1
    %v138 = vadd.f32 %v136, %v137
    %v139 = vrcp.pop 8.0
    %v140 = vmul.f32 8.0, %v139
    %v141 = vsub.f32 1.0, %v140
    %v142 = vmul.f32 %v139, %v141
    %v143 = vadd.f32 %v139, %v142
    %vm144 = vweird.f32 %v139
    %v145 = vsel %vm144, %v139, %v143
    %v146 = vmul.f32 %v138, %v145
    %v147 = vsub.f32 %v131, %v146
    %v148 = vmul.f32 %v147, %v147
    %v149 = vrot.slane %v148, 4
    %v150 = vadd.f32 %v148, %v149
    %v151 = vrot.slane %v150, 2
    %v152 = vadd.f32 %v150, %v151
    %v153 = vrot.slane %v152, 1
    %v154 = vadd.f32 %v152, %v153
    %v155 = vmul.f32 %v154, %v145
    %v156 = vld [vmem:[%s3] sm:$0x1]
    %v157 = vadd.f32 %v155, 1e-05
    %v158 = vrsqrt.pop %v157
    %v159 = vmul.f32 %v158, %v157
    %v160 = vmul.f32 %v159, %v158
    %v161 = vmul.f32 0.5, %v160
    %v162 = vsub.f32 1.5, %v161
    %v163 = vmul.f32 %v158, %v162
    %vm164 = vweird.f32 %v157
    %vm165 = vweird.f32 %v158
    %vm166 = vmor %vm164, %vm165
    %v167 = vsel %vm166, %v158, %v163
    %v168 = vmul.f32 %v156, %v167
    %v170 = vperm.slane %v168, 0
    %v172 = vmul.f32 %v147, %v170
    %v173 = vld [vmem:[%s4] sm:$0x1]
    %v175 = vperm.slane %v173, 0
    %v177 = vadd.f32 %v172, %v175
    %s178 = sld [smem:[#allocation2]]
    %vm179 = vcmp.gt.f32.partialorder %v177, 0.0
    %v180 = vstv %s178
    %v181 = vmul.f32 %v180, %v177
    %v182 = vsel %vm179, %v177, %v181
    %v183 = vld [vmem:[#allocation7] sm:$0xff]
    %v184 = vld [vmem:[#allocation7 + $0x8] sm:$0xff]
    %v185 = vld [vmem:[#allocation7 + $0x10] sm:$0xff]
    %v186 = vld [vmem:[#allocation7 + $0x18] sm:$0xff]
    %v187 = vld [vmem:[#allocation7 + $0x20] sm:$0xff]
    %v188 = vld [vmem:[#allocation7 + $0x28] sm:$0xff]
    %v189 = vld [vmem:[#allocation7 + $0x30] sm:$0xff]
    %v190 = vld [vmem:[#allocation7 + $0x38] sm:$0xff]
    %v191 = vld [vmem:[#allocation7 + $0x40] sm:$0xff]
    %v192 = vld [vmem:[#allocation7 + $0x48] sm:$0xff]
    %v193 = vld [vmem:[#allocation7 + $0x50] sm:$0xff]
    %v194 = vld [vmem:[#allocation7 + $0x58] sm:$0xff]
    %v195 = vld [vmem:[#allocation7 + $0x60] sm:$0xff]
    %v196 = vld [vmem:[#allocation7 + $0x68] sm:$0xff]
    %v197 = vld [vmem:[#allocation7 + $0x70] sm:$0xff]
    %v198 = vld [vmem:[#allocation7 + $0x78] sm:$0xff]
    %199 = vmatpush.msra.mxu0 %v198
    %200 = vmatpush.msra.mxu0 %v197
    %201 = vmatpush.msra.mxu0 %v196
    %202 = vmatpush.msra.mxu0 %v195
    %203 = vmatpush.msra.mxu0 %v194
    %204 = vmatpush.msra.mxu0 %v193
    %205 = vmatpush.msra.mxu0 %v192
    %206 = vmatpush.msra.mxu0 %v191
    %207 = vmatpush.msra.mxu0 %v190
    %208 = vmatpush.msra.mxu0 %v189
    %209 = vmatpush.msra.mxu0 %v188
    %210 = vmatpush.msra.mxu0 %v187
    %211 = vmatpush.msra.mxu0 %v186
    %212 = vmatpush.msra.mxu0 %v185
    %213 = vmatpush.msra.mxu0 %v184
    %214 = vmatpush.msra.mxu0 %v183
    %215 = vmatmul.f32.gmra.mxu0 %v182
    %v216 = vpop.f32.mrf.mxu0
    %v217 = vadd.f32 0.0, %v216
    %218 = vdwg.mxu0
    %v219 = vrot.slane %v217, 4
    %v220 = vadd.f32 %v217, %v219
    %v221 = vrot.slane %v220, 2
    %v222 = vadd.f32 %v220, %v221
    %v223 = vrot.slane %v222, 1
    %v224 = vadd.f32 %v222, %v223
    %v225 = vmul.f32 %v224, %v145
    %v226 = vsub.f32 %v217, %v225
    %v227 = vmul.f32 %v226, %v226
    %v228 = vrot.slane %v227, 4
    %v229 = vadd.f32 %v227, %v228
    %v230 = vrot.slane %v229, 2
    %v231 = vadd.f32 %v229, %v230
    %v232 = vrot.slane %v231, 1
    %v233 = vadd.f32 %v231, %v232
    %v234 = vmul.f32 %v233, %v145
    %v235 = vld [vmem:[%s6] sm:$0x1]
    %v236 = vadd.f32 %v234, 1e-05
    %v237 = vrsqrt.pop %v236
    %v238 = vmul.f32 %v237, %v236
    %v239 = vmul.f32 %v238, %v237
    %v240 = vmul.f32 0.5, %v239
    %v241 = vsub.f32 1.5, %v240
    %v242 = vmul.f32 %v237, %v241
    %vm243 = vweird.f32 %v236
    %vm244 = vweird.f32 %v237
    %vm245 = vmor %vm243, %vm244
    %v246 = vsel %vm245, %v237, %v242
    %v247 = vmul.f32 %v235, %v246
    %v249 = vperm.slane %v247, 0
    %v251 = vmul.f32 %v226, %v249
    %v252 = vld [vmem:[%s7] sm:$0x1]
    %v254 = vperm.slane %v252, 0
    %v256 = vadd.f32 %v251, %v254
    %s257 = sld [smem:[#allocation2 + $0x1]]
    %vm258 = vcmp.gt.f32.partialorder %v256, 0.0
    %v259 = vstv %s257
    %v260 = vmul.f32 %v259, %v256
    %v261 = vsel %vm258, %v256, %v260
    %v262 = vld [vmem:[#allocation9] sm:$0xff]
    %v263 = vld [vmem:[#allocation9 + $0x8] sm:$0xff]
    %v264 = vld [vmem:[#allocation9 + $0x10] sm:$0xff]
    %v265 = vld [vmem:[#allocation9 + $0x18] sm:$0xff]
    %v266 = vld [vmem:[#allocation9 + $0x20] sm:$0xff]
    %v267 = vld [vmem:[#allocation9 + $0x28] sm:$0xff]
    %v268 = vld [vmem:[#allocation9 + $0x30] sm:$0xff]
    %v269 = vld [vmem:[#allocation9 + $0x38] sm:$0xff]
    %v270 = vld [vmem:[#allocation9 + $0x40] sm:$0xff]
    %v271 = vld [vmem:[#allocation9 + $0x48] sm:$0xff]
    %v272 = vld [vmem:[#allocation9 + $0x50] sm:$0xff]
    %v273 = vld [vmem:[#allocation9 + $0x58] sm:$0xff]
    %v274 = vld [vmem:[#allocation9 + $0x60] sm:$0xff]
    %v275 = vld [vmem:[#allocation9 + $0x68] sm:$0xff]
    %v276 = vld [vmem:[#allocation9 + $0x70] sm:$0xff]
    %v277 = vld [vmem:[#allocation9 + $0x78] sm:$0xff]
    %v278 = vld [vmem:[%s9] sm:$0x1]
    %v280 = vperm.slane %v278, 0
    %282 = vmatpush.msra.mxu0 %v277
    %283 = vmatpush.msra.mxu0 %v276
    %284 = vmatpush.msra.mxu0 %v275
    %285 = vmatpush.msra.mxu0 %v274
    %286 = vmatpush.msra.mxu0 %v273
    %287 = vmatpush.msra.mxu0 %v272
    %288 = vmatpush.msra.mxu0 %v271
    %289 = vmatpush.msra.mxu0 %v270
    %290 = vmatpush.msra.mxu0 %v269
    %291 = vmatpush.msra.mxu0 %v268
    %292 = vmatpush.msra.mxu0 %v267
    %293 = vmatpush.msra.mxu0 %v266
    %294 = vmatpush.msra.mxu0 %v265
    %295 = vmatpush.msra.mxu0 %v264
    %296 = vmatpush.msra.mxu0 %v263
    %297 = vmatpush.msra.mxu0 %v262
    %298 = vmatmul.f32.gmra.mxu0 %v261
    %v299 = vpop.f32.mrf.mxu0
    %v300 = vadd.f32 %v280, %v299
    %301 = vdwg.mxu0
    %302 = vst [vmem:[#allocation10] sm:$0xff] %v300
    // Predicated region
    $region58: #{pxz_forward.1} parent=1 // pred_check
      _
    $region59: #{pxz_forward.1} parent=1 // pred_check_branch
      %304 = sbr.rel (0) target = $region61
    $region60: #{pxz_forward.1} parent=1 // pred_region
      %306 = vsyncadd [#allocation4], 0
      %s308 = sshll.u32 [#allocation10], 4
      %s309 = int_to_ptr.vmem [resolvable:$true] %s308
      %s310 = sshll.u32 %s10, 4
      %s311 = int_to_ptr.hbm [resolvable:$true] %s310
      %313 = dma.vmem_to_hbm [thread:$0]  %s309, 128, %s311, [#allocation4]
    $region61: #{pxz_forward.1} parent=1 // pred_fallthru
      _
    // Predicated region
    $region62: #{pxz_forward.1} parent=1 // pred_check
      _
    $region63: #{pxz_forward.1} parent=1 // pred_check_branch
      %315 = sbr.rel (0) target = $region65
    $region64: #{pxz_forward.1} parent=1 // pred_region
      %317 = dma.done [#allocation4], 128
    $region65: #{pxz_forward.1} parent=1 // pred_fallthru
      _
    %318 = vsyncpa [#allocation3], 1
    %319 = vsyncpa [#allocation8], 1
    %320 = vsyncpa [#allocation4], 1
    %321 = vsyncpa [#allocation5], 1

</llo_original>
